<compile_context>
chip_gen: v5e
topology: v5e:2x2
jax: 0.10.0
libtpu: 0.0.40
codegen_flags: <defaults>
</compile_context>

<pallas_src>
import functools

import jax
import jax.numpy as jnp
from jax.experimental import pallas as pl
from jax.experimental.pallas import tpu as pltpu


def _top1_loss_kernel(x_ref, d_ref, out_ref):
    i = pl.program_id(0)
    nsteps = pl.num_programs(0)

    x = x_ref[...].astype(jnp.float32)      # (TM, B) row stripe
    d = d_ref[...].astype(jnp.float32)      # (TM, TM) diagonal block
    tm = d.shape[0]
    n = x.shape[1]                          # B (static)

    # Diagonal of this stripe: mask the (TM, TM) diagonal block and row-reduce
    # (gather has no cheap TPU lowering; mask + XLU reduce is cheap filler).
    r = jax.lax.broadcasted_iota(jnp.int32, (tm, tm), 0)
    c = jax.lax.broadcasted_iota(jnp.int32, (tm, tm), 1)
    diag = jnp.sum(jnp.where(r == c, d, 0.0), axis=1, keepdims=True)  # (TM, 1)

    # Fused: one elementwise pass (2 EUP sigmoids) + one reduction per stripe.
    s = jax.nn.sigmoid(x - diag) + jax.nn.sigmoid(x * x)
    partial = jnp.sum(s, keepdims=True).astype(jnp.float32)           # (1, 1)

    @pl.when(i == 0)
    def _init():
        out_ref[...] = jnp.zeros_like(out_ref)

    out_ref[...] += partial

    @pl.when(i == nsteps - 1)
    def _finalize():
        out_ref[...] = out_ref[...] * jnp.float32(1.0 / (n * n))


_MAX_STRIPE_BYTES = 4 * 1024 * 1024  # per-buffer stripe budget (safe on v5e/v6e/v7x)


def _pick_tm(B: int, itemsize: int) -> int:
    """Row-stripe height TM. Must divide B; the (TM, TM) diagonal block obeys the
    (8,128) lane rule, so TM is a multiple of 128 unless TM == B (full block)."""
    candidates = [tm for tm in (1024, 512, 256, 128) if B % tm == 0]
    for tm in candidates:  # largest stripe that fits the budget
        if tm * B * itemsize <= _MAX_STRIPE_BYTES:
            return tm
    if candidates:
        return candidates[-1]
    return B  # small / awkward B: single full-matrix block


@functools.partial(jax.jit, static_argnames=("tm",))
def top1_loss(logit: jax.Array, tm: int | None = None) -> jax.Array:
    """TOP1 loss for a (B, B) logit matrix. Returns a scalar float32."""
    B1, B2 = logit.shape
    assert B1 == B2, "TOP1Loss expects a square (B, B) logit matrix"
    B = B1
    itemsize = jnp.dtype(logit.dtype).itemsize

    TM = tm if tm is not None else _pick_tm(B, itemsize)
    assert B % TM == 0, f"stripe height {TM} must divide B={B}"
    grid = (B // TM,)

    stripe_bytes = TM * B * itemsize
    diag_bytes = TM * TM * itemsize
    vmem_limit = int(min(64 * 2**20,
                         max(32 * 2**20, 8 * stripe_bytes + 4 * diag_bytes)))

    out = pl.pallas_call(
        _top1_loss_kernel,
        out_shape=jax.ShapeDtypeStruct((1, 1), jnp.float32),
        grid_spec=pltpu.PrefetchScalarGridSpec(
            num_scalar_prefetch=0,
            grid=grid,
            in_specs=[
                pl.BlockSpec((TM, B), lambda i: (i, 0)),    # row stripe
                pl.BlockSpec((TM, TM), lambda i: (i, i)),   # diagonal block
            ],
            out_specs=pl.BlockSpec((1, 1), lambda i: (0, 0)),
        ),
        compiler_params=pltpu.CompilerParams(
            dimension_semantics=("arbitrary",),   # serial accumulation axis
            vmem_limit_bytes=vmem_limit,
        ),
        cost_estimate=pl.CostEstimate(
            flops=6 * B * B,
            transcendentals=2 * B * B,
            bytes_accessed=(B * B + B * TM) * itemsize + 4,
        ),
    )(logit, logit)
    return out[0, 0]


def top1_loss_ref(logit: jax.Array) -> jax.Array:
    """Pure-JAX reference matching the PyTorch module."""
    x = logit.astype(jnp.float32)
    diag = jnp.diag(x).reshape(-1, 1)
    return jax.nn.sigmoid(x - diag).mean() + jax.nn.sigmoid(x * x).mean()


if __name__ == "__main__":
    key0, key1 = jax.random.split(jax.random.PRNGKey(0))

    # Small case matching the module's (B, B) logit convention (single block).
    B = 8
    logit = jax.random.normal(key0, (B, B), dtype=jnp.float32)
    loss = jax.block_until_ready(top1_loss(logit))
    ref = jax.block_until_ready(top1_loss_ref(logit))
    assert jnp.allclose(loss, ref, rtol=1e-5, atol=1e-6), (loss, ref)

    # Exercise the multi-stripe accumulation path (grid > 1).
    B2 = 256
    logit2 = jax.random.normal(key1, (B2, B2), dtype=jnp.float32)
    loss2 = jax.block_until_ready(top1_loss(logit2, tm=128))
    ref2 = jax.block_until_ready(top1_loss_ref(logit2))
    assert jnp.allclose(loss2, ref2, rtol=1e-5, atol=1e-6), (loss2, ref2)

    # bf16 streaming path: input stays bf16 in HBM, cast per stripe in-kernel.
    logit3 = logit2.astype(jnp.bfloat16)
    loss3 = jax.block_until_ready(top1_loss(logit3, tm=128))
    ref3 = jax.block_until_ready(top1_loss_ref(logit3))
    assert jnp.allclose(loss3, ref3, rtol=1e-4, atol=1e-5), (loss3, ref3)

    print("KERNEL_OK")
</pallas_src>

<mosaic_0001>
module attributes {stable_mosaic.version = 11 : i64} {
  func.func @_top1_loss_kernel(%arg0: i32, %arg1: memref<8x8xf32, #tpu.memory_space<vmem>>, %arg2: memref<8x8xf32, #tpu.memory_space<vmem>>, %arg3: memref<1x1xf32, #tpu.memory_space<vmem>>) attributes {dimension_semantics = [#tpu.dimension_semantics<arbitrary>], iteration_bounds = array<i64: 1>, scalar_prefetch = 0 : i64, scratch_operands = 0 : i64, tpu.core_type = #tpu.core_type<tc>, window_params = [{transform_indices = @transform_0, window_bounds = array<i64: 8, 8>}, {transform_indices = @transform_1, window_bounds = array<i64: 8, 8>}, {pipeline_mode = #tpu.pipeline_mode<synchronous>, transform_indices = @transform_2, window_bounds = array<i64: 1, 1>}]} {
    %c0 = arith.constant 0 : index
    %c0_0 = arith.constant 0 : index
    %0 = vector.load %arg1[%c0, %c0_0] : memref<8x8xf32, #tpu.memory_space<vmem>>, vector<8x8xf32>
    %c0_1 = arith.constant 0 : index
    %c0_2 = arith.constant 0 : index
    %1 = vector.load %arg2[%c0_1, %c0_2] : memref<8x8xf32, #tpu.memory_space<vmem>>, vector<8x8xf32>
    %2 = tpu.iota {dimensions = array<i32: 0>} : vector<8x8xi32>
    %3 = tpu.iota {dimensions = array<i32: 1>} : vector<8x8xi32>
    %4 = arith.cmpi eq, %2, %3 : vector<8x8xi32>
    %cst = arith.constant 0.000000e+00 : f32
    %5 = vector.broadcast %cst : f32 to vector<8x8xf32>
    %6 = arith.select %4, %1, %5 : vector<8x8xi1>, vector<8x8xf32>
    %cst_3 = arith.constant dense<0.000000e+00> : vector<8xf32>
    %7 = vector.multi_reduction <add>, %6, %cst_3 [1] : vector<8x8xf32> to vector<8xf32>
    %8 = vector.shape_cast %7 : vector<8xf32> to vector<8x1xf32>
    %9 = vector.broadcast %8 : vector<8x1xf32> to vector<8x8xf32>
    %10 = arith.subf %0, %9 : vector<8x8xf32>
    %11 = arith.negf %10 : vector<8x8xf32>
    %12 = math.exp %11 : vector<8x8xf32>
    %cst_4 = arith.constant 1.000000e+00 : f32
    %13 = vector.broadcast %cst_4 : f32 to vector<8x8xf32>
    %14 = arith.addf %13, %12 : vector<8x8xf32>
    %15 = arith.divf %13, %14 : vector<8x8xf32>
    %16 = arith.mulf %0, %0 : vector<8x8xf32>
    %17 = arith.negf %16 : vector<8x8xf32>
    %18 = math.exp %17 : vector<8x8xf32>
    %cst_5 = arith.constant 1.000000e+00 : f32
    %19 = vector.broadcast %cst_5 : f32 to vector<8x8xf32>
    %20 = arith.addf %19, %18 : vector<8x8xf32>
    %21 = arith.divf %19, %20 : vector<8x8xf32>
    %22 = arith.addf %15, %21 : vector<8x8xf32>
    %23 = vector.shape_cast %22 : vector<8x8xf32> to vector<1x8x8xf32>
    %cst_6 = arith.constant dense<0.000000e+00> : vector<1xf32>
    %24 = vector.multi_reduction <add>, %23, %cst_6 [1, 2] : vector<1x8x8xf32> to vector<1xf32>
    %25 = vector.shape_cast %24 : vector<1xf32> to vector<1x1x1xf32>
    %26 = vector.extract %25[0, 0, 0] : f32 from vector<1x1x1xf32>
    %27 = vector.broadcast %26 : f32 to vector<1x1xf32>
    %c0_i32 = arith.constant 0 : i32
    %28 = arith.cmpi eq, %arg0, %c0_i32 : i32
    %29 = arith.extui %28 : i1 to i32
    %c0_i32_7 = arith.constant 0 : i32
    %30 = arith.cmpi ne, %29, %c0_i32_7 : i32
    scf.if %30 {
      %cst_14 = arith.constant 0.000000e+00 : f32
      %37 = vector.broadcast %cst_14 : f32 to vector<1x1xf32>
      %c0_15 = arith.constant 0 : index
      %c0_16 = arith.constant 0 : index
      %38 = vector.load %arg3[%c0_15, %c0_16] : memref<1x1xf32, #tpu.memory_space<vmem>>, vector<1x1xf32>
      tpu.vector_store %arg3[%c0_15, %c0_16], %37 {strides = array<i32>} : memref<1x1xf32, #tpu.memory_space<vmem>>, vector<1x1xf32>,
    } else {
    }
    %c0_8 = arith.constant 0 : index
    %c0_9 = arith.constant 0 : index
    %31 = vector.load %arg3[%c0_8, %c0_9] : memref<1x1xf32, #tpu.memory_space<vmem>>, vector<1x1xf32>
    %32 = arith.addf %31, %27 : vector<1x1xf32>
    %c0_10 = arith.constant 0 : index
    %c0_11 = arith.constant 0 : index
    %33 = vector.load %arg3[%c0_10, %c0_11] : memref<1x1xf32, #tpu.memory_space<vmem>>, vector<1x1xf32>
    tpu.vector_store %arg3[%c0_10, %c0_11], %32 {strides = array<i32>} : memref<1x1xf32, #tpu.memory_space<vmem>>, vector<1x1xf32>,
    %c0_i32_12 = arith.constant 0 : i32
    %34 = arith.cmpi eq, %arg0, %c0_i32_12 : i32
    %35 = arith.extui %34 : i1 to i32
    %c0_i32_13 = arith.constant 0 : i32
    %36 = arith.cmpi ne, %35, %c0_i32_13 : i32
    scf.if %36 {
      %c0_14 = arith.constant 0 : index
      %c0_15 = arith.constant 0 : index
      %37 = vector.load %arg3[%c0_14, %c0_15] : memref<1x1xf32, #tpu.memory_space<vmem>>, vector<1x1xf32>
      %cst_16 = arith.constant 1.562500e-02 : f32
      %38 = vector.broadcast %cst_16 : f32 to vector<1x1xf32>
      %39 = arith.mulf %37, %38 : vector<1x1xf32>
      %c0_17 = arith.constant 0 : index
      %c0_18 = arith.constant 0 : index
      %40 = vector.load %arg3[%c0_17, %c0_18] : memref<1x1xf32, #tpu.memory_space<vmem>>, vector<1x1xf32>
      tpu.vector_store %arg3[%c0_17, %c0_18], %39 {strides = array<i32>} : memref<1x1xf32, #tpu.memory_space<vmem>>, vector<1x1xf32>,
    } else {
    }
    return
  }
  func.func @transform_0(%arg0: i32) -> (i32, i32) {
    %c0_i32 = arith.constant 0 : i32
    %c0_i32_0 = arith.constant 0 : i32
    return %arg0, %c0_i32 : i32, i32
  }
  func.func @transform_1(%arg0: i32) -> (i32, i32) {
    %c0_i32 = arith.constant 0 : i32
    return %arg0, %arg0 : i32, i32
  }
  func.func @transform_2(%arg0: i32) -> (i32, i32) {
    %c0_i32 = arith.constant 0 : i32
    %c0_i32_0 = arith.constant 0 : i32
    %c0_i32_1 = arith.constant 0 : i32
    return %c0_i32, %c0_i32_0 : i32, i32
  }
}

</mosaic_0001>

<llo_original>
// kernel: top1_loss.1
$region0: #{top1_loss.1}
  #allocation0 [shape = 'u32[]', space=smem, size = 0x4, offset = 0x4, fixed_abs, tag = 'smem constant byte address 0x4 - core index']
  #allocation1 [shape = 'u32[72,128]{1,0:T(1,128)}', space=vmem, size = 0x9000, scoped, tag = 'internal scratch']
  %s0 = inlined_call_operand.hbm [shape: f32[8,8], index: 0, kind: input, shape index: {}, may-alias: {0,1}]
  %s1 = inlined_call_operand.hbm [shape: f32[8,8], index: 1, kind: input, shape index: {}, may-alias: {0,1}]
  %s2 = inlined_call_operand.hbm [shape: f32[1,1], index: 2, kind: output, shape index: {}]
  %s3 = sld [smem:[#allocation0]]
  $region34: #{top1_loss.1} parent=0
    _
  %s5 = ssub.s32 1, %s3
  %s6 = scalar_select 0, %s5, %s3
  $region1: #{top1_loss.1} parent=0
    #allocation2 [shape = 'u8[4096]{0}', space=vmem, size = 0x1000, scoped, tag = 'input window, operand 0, single buffered']
    #allocation3 [shape = 's32[1]{0}', space=sflag, size = 0x4, scoped, tag = 'scoped memory for top1_loss.1']
    #allocation4 [shape = 's32[1]{0}', space=sflag, size = 0x4, scoped, tag = 'scoped memory for top1_loss.1']
    #allocation5 [shape = 'u8[4096]{0}', space=vmem, size = 0x1000, scoped, tag = 'input window, operand 1, single buffered']
    #allocation6 [shape = 's32[1]{0}', space=sflag, size = 0x4, scoped, tag = 'scoped memory for top1_loss.1']
    #allocation7 [shape = 'u8[512]{0}', space=vmem, size = 0x400, scoped, tag = 'output window, operand 0, single buffered']
    %7 = vsyncpa [#allocation3], 0
    %8 = vsyncpa [#allocation6], 0
    %9 = vsyncpa [#allocation4], 0
    // Predicated region
    $region2: #{top1_loss.1} parent=1 // pred_check
      _
    $region3: #{top1_loss.1} parent=1 // pred_check_branch
      %11 = sbr.rel (0) target = $region5
    $region4: #{top1_loss.1} parent=1 // pred_region
      %13 = vsyncadd [#allocation3], 0
      %s15 = sshll.u32 %s0, 4
      %s16 = int_to_ptr.hbm [resolvable:$true] %s15
      %s17 = sshll.u32 [#allocation2], 4
      %s18 = int_to_ptr.vmem [resolvable:$true] %s17
      %20 = dma.hbm_to_vmem [thread:$0]  %s16, 128, %s18, [#allocation3]
    $region5: #{top1_loss.1} parent=1 // pred_fallthru
      _
    // Predicated region
    $region6: #{top1_loss.1} parent=1 // pred_check
      _
    $region7: #{top1_loss.1} parent=1 // pred_check_branch
      %22 = sbr.rel (0) target = $region9
    $region8: #{top1_loss.1} parent=1 // pred_region
      %24 = vsyncadd [#allocation6], 0
      %s26 = sshll.u32 %s1, 4
      %s27 = int_to_ptr.hbm [resolvable:$true] %s26
      %s28 = sshll.u32 [#allocation5], 4
      %s29 = int_to_ptr.vmem [resolvable:$true] %s28
      %31 = dma.hbm_to_vmem [thread:$0]  %s27, 128, %s29, [#allocation6]
    $region9: #{top1_loss.1} parent=1 // pred_fallthru
      _
    // Predicated region
    $region10: #{top1_loss.1} parent=1 // pred_check
      _
    $region11: #{top1_loss.1} parent=1 // pred_check_branch
      %33 = sbr.rel (0) target = $region13
    $region12: #{top1_loss.1} parent=1 // pred_region
      %35 = dma.done [#allocation3], 128
    $region13: #{top1_loss.1} parent=1 // pred_fallthru
      _
    // Predicated region
    $region14: #{top1_loss.1} parent=1 // pred_check
      _
    $region15: #{top1_loss.1} parent=1 // pred_check_branch
      %37 = sbr.rel (0) target = $region17
    $region16: #{top1_loss.1} parent=1 // pred_region
      %39 = dma.done [#allocation6], 128
    $region17: #{top1_loss.1} parent=1 // pred_fallthru
      _
    %v40 = vld [vmem:[#allocation2] sm:$0xff]
    %v41 = vld [vmem:[#allocation5] sm:$0xff]
    %v42 = vlaneseq
    %v43 = vshrl.u32 %v42, 7
    %v44 = vlaneseq
    %v45 = vand.u32 %v44, 127
    %vm46 = vcmp.eq.s32.totalorder %v43, %v45
    %v47 = vsel %vm46, %v41, 0.0
    %vm48 = vcmask 64512
    %v49 = vsel %vm48, %v47, 0.0
    %50 = vadd.xlane.f32.xlu0 %v49
    %v51 = vpop.xlane.xlu0 %50
    %v52 = vsub.f32 %v40, %v51
    %v53 = vxor.u32 %v52, 2147483648
    %v54 = vmul.f32 %v53, 1.442695
    %v55 = vpow.pop %v54
    %v56 = vadd.f32 %v55, 1.0
    %v57 = vrcp.pop %v56
    %v58 = vmul.f32 %v56, %v57
    %v59 = vsub.f32 1.0, %v58
    %v60 = vmul.f32 %v57, %v59
    %v61 = vadd.f32 %v57, %v60
    %vm62 = vweird.f32 %v56
    %vm63 = vweird.f32 %v57
    %vm64 = vmor %vm62, %vm63
    %v65 = vsel %vm64, %v57, %v61
    %v66 = vand.u32 2147483647, %v56
    %vm67 = vcmp.eq.f32.partialorder %v66, 8.507059e+37
    %v68 = vand.u32 %v56, 2147483648
    %v69 = vor.u32 1.1754944e-38, %v68
    %v70 = vsel %vm67, %v69, %v65
    %v71 = vmul.f32 1.0, %v70
    %v72 = vmul.f32 %v40, %v40
    %v73 = vxor.u32 %v72, 2147483648
    %v74 = vmul.f32 %v73, 1.442695
    %v75 = vpow.pop %v74
    %v76 = vadd.f32 %v75, 1.0
    %v77 = vrcp.pop %v76
    %v78 = vmul.f32 %v76, %v77
    %v79 = vsub.f32 1.0, %v78
    %v80 = vmul.f32 %v77, %v79
    %v81 = vadd.f32 %v77, %v80
    %vm82 = vweird.f32 %v76
    %vm83 = vweird.f32 %v77
    %vm84 = vmor %vm82, %vm83
    %v85 = vsel %vm84, %v77, %v81
    %v86 = vand.u32 2147483647, %v76
    %vm87 = vcmp.eq.f32.partialorder %v86, 8.507059e+37
    %v88 = vand.u32 %v76, 2147483648
    %v89 = vor.u32 1.1754944e-38, %v88
    %v90 = vsel %vm87, %v89, %v85
    %v91 = vmul.f32 1.0, %v90
    %v92 = vadd.f32 %v71, %v91
    %v93 = vsel %vm48, %v92, 0.0
    %94 = vadd.xlane.f32.xlu0 %v93
    %v95 = vpop.xlane.xlu0 %94
    %v96 = vrot.slane %v95, 4
    %v97 = vadd.f32 %v95, %v96
    %v98 = vrot.slane %v97, 2
    %v99 = vadd.f32 %v97, %v98
    %v100 = vrot.slane %v99, 1
    %v101 = vadd.f32 %v99, %v100
    %s102 = vtos %v101
    %v103 = vstv %s102
    %p104 = scmp.eq.s32.totalorder 0, 0
    // Predicated region
    $region18: #{top1_loss.1} parent=1 // pred_check
      %p105 = pneg %p104
    $region19: #{top1_loss.1} parent=1 // pred_check_branch
      %107 = sbr.rel (%p105) target = $region21
    $region20: #{top1_loss.1} parent=1 // pred_region
      %vm108 = vcmask 0
      %109 = vst.msk [vmem:[#allocation7] sm:$0x1] %vm108, 0.0
    $region21: #{top1_loss.1} parent=1 // pred_fallthru
      _
    %v110 = vld [vmem:[#allocation7] sm:$0x1]
    %v111 = vadd.f32 %v110, %v103
    %vm112 = vcmask 0
    %113 = vst.msk [vmem:[#allocation7] sm:$0x1] %vm112, %v111
    // Predicated region
    $region22: #{top1_loss.1} parent=1 // pred_check
      %p114 = pneg %p104
    $region23: #{top1_loss.1} parent=1 // pred_check_branch
      %116 = sbr.rel (%p114) target = $region25
    $region24: #{top1_loss.1} parent=1 // pred_region
      %v117 = vld [vmem:[#allocation7] sm:$0x1]
      %v118 = vmul.f32 %v117, 0.015625
      %119 = vst.msk [vmem:[#allocation7] sm:$0x1] %vm112, %v118
    $region25: #{top1_loss.1} parent=1 // pred_fallthru
      _
    // Predicated region
    $region26: #{top1_loss.1} parent=1 // pred_check
      _
    $region27: #{top1_loss.1} parent=1 // pred_check_branch
      %121 = sbr.rel (0) target = $region29
    $region28: #{top1_loss.1} parent=1 // pred_region
      %123 = vsyncadd [#allocation4], 0
      %s125 = sshll.u32 [#allocation7], 4
      %s126 = int_to_ptr.vmem [resolvable:$true] %s125
      %s127 = sshll.u32 %s2, 4
      %s128 = int_to_ptr.hbm [resolvable:$true] %s127
      %130 = dma.vmem_to_hbm [thread:$0]  %s126, 16, %s128, [#allocation4]
    $region29: #{top1_loss.1} parent=1 // pred_fallthru
      _
    // Predicated region
    $region30: #{top1_loss.1} parent=1 // pred_check
      _
    $region31: #{top1_loss.1} parent=1 // pred_check_branch
      %132 = sbr.rel (0) target = $region33
    $region32: #{top1_loss.1} parent=1 // pred_region
      %134 = dma.done [#allocation4], 16
    $region33: #{top1_loss.1} parent=1 // pred_fallthru
      _
    %135 = vsyncpa [#allocation3], 1
    %136 = vsyncpa [#allocation6], 1
    %137 = vsyncpa [#allocation4], 1

</llo_original>
